<compile_context>
chip_gen: v7x
topology: tpu7x:2x2x1
jax: 0.10.0
libtpu: 0.0.40
codegen_flags: <defaults>
</compile_context>

<pallas_src>
import jax
import jax.numpy as jnp
from jax.experimental import pallas as pl
from jax.experimental.pallas import tpu as pltpu


def _cls_head_kernel(x_ref, w_ref, b_ref, o_ref):
    """x: (TB, H) CLS hidden states (VMEM), w: (2, H) lane-dense (VMEM),
    b: (2,) scalars (SMEM), o: (TB, 2) softmax probabilities (VMEM)."""
    x = x_ref[...].astype(jnp.float32)                              # f32 accumulate (v5e-safe)
    w_diff = (w_ref[1:2, :] - w_ref[0:1, :]).astype(jnp.float32)    # (1, H), H on lanes
    b_diff = b_ref[1] - b_ref[0]

    # softmax over 2 classes == sigmoid of the logit difference:
    #   p1 = 1 / (1 + exp(-(x.(w1-w0) + (b1-b0)))),  p0 = 1 - p1
    # VPU broadcast-mul + single XLU lane-reduce; MXU would waste >98% of its
    # output lanes at C = 2.
    d = jnp.sum(x * w_diff, axis=-1, keepdims=True) + b_diff        # (TB, 1)
    p1 = pl.reciprocal(1.0 + jnp.exp(-d), approx=True)              # exp on EUP, rcp on EUP
    p0 = 1.0 - p1                                                   # exact complement

    o_ref[:, 0:1] = p0.astype(o_ref.dtype)
    o_ref[:, 1:2] = p1.astype(o_ref.dtype)


def cls_head_softmax(cls_hidden, fc_weight, fc_bias, *, batch_tile=8):
    """Equivalent of: softmax(Linear(768, 2)(cls_hidden), dim=1).

    cls_hidden: (B, H) float32   CLS-token hidden states (already sliced)
    fc_weight:  (2, H) float32   PyTorch Linear layout, kept lane-dense
    fc_bias:    (2,)   float32
    returns:    (B, 2) float32
    """
    B, H = cls_hidden.shape
    C, H_w = fc_weight.shape
    assert C == 2 and H_w == H

    cost = pl.CostEstimate(
        flops=2 * B * H + 8 * B,
        transcendentals=B,
        bytes_accessed=4 * (B * H + C * H + C + B * C),
    )
    weight_spec = pl.BlockSpec(memory_space=pltpu.MemorySpace.VMEM)   # (2, H) whole, resident
    bias_spec = pl.BlockSpec(memory_space=pltpu.MemorySpace.SMEM)     # (2,) scalars

    if B % batch_tile == 0 and B // batch_tile > 1:
        # Batched path: sublane-aligned (batch_tile, H) blocks; parallel grid
        # axis lets v7x's two TensorCores split the batch.
        return pl.pallas_call(
            _cls_head_kernel,
            out_shape=jax.ShapeDtypeStruct((B, C), jnp.float32),
            grid=(B // batch_tile,),
            in_specs=[
                pl.BlockSpec((batch_tile, H), lambda i: (i, 0)),
                weight_spec,
                bias_spec,
            ],
            out_specs=pl.BlockSpec((batch_tile, C), lambda i: (i, 0)),
            compiler_params=pltpu.CompilerParams(
                dimension_semantics=("parallel",)),
            cost_estimate=cost,
        )(cls_hidden, fc_weight, fc_bias)

    # Small-batch path: single invocation, whole (B, H) resident (tiny).
    return pl.pallas_call(
        _cls_head_kernel,
        out_shape=jax.ShapeDtypeStruct((B, C), jnp.float32),
        in_specs=[
            pl.BlockSpec(memory_space=pltpu.MemorySpace.VMEM),
            weight_spec,
            bias_spec,
        ],
        out_specs=pl.BlockSpec(memory_space=pltpu.MemorySpace.VMEM),
        cost_estimate=cost,
    )(cls_hidden, fc_weight, fc_bias)


def pretrained_stub(input_ids, attention_mask, token_type_ids, params):
    """Deterministic stand-in for the frozen `pretrained` BERT backbone.

    Produces a (B, S, 768) last_hidden_state from the token ids; this is
    plain-JAX glue, not the hot path of the Module itself.
    """
    tok_emb = params["tok_emb"][input_ids]           # (B, S, H)
    typ_emb = params["typ_emb"][token_type_ids]      # (B, S, H)
    h = tok_emb + typ_emb
    h = h * attention_mask[..., None].astype(h.dtype)
    return h


def model_forward(input_ids, attention_mask, token_type_ids, stub_params,
                  fc_weight, fc_bias):
    # TODO(synk): frozen pretrained BERT encoder replaced by embedding stub.
    last_hidden_state = pretrained_stub(
        input_ids, attention_mask, token_type_ids, stub_params)
    # CLS slice in plain JAX (fuses upstream): only (B, H) crosses the
    # pallas_call boundary, not (B, S, H).
    cls_hidden = last_hidden_state[:, 0, :]
    return cls_head_softmax(cls_hidden, fc_weight, fc_bias), last_hidden_state


if __name__ == "__main__":
    B, S, H, C = 2, 8, 768, 2
    VOCAB = 32

    key = jax.random.PRNGKey(0)
    k_ids, k_tok, k_typ, k_w, k_b, k_h2 = jax.random.split(key, 6)

    # deterministic example inputs (shapes consistent with BERT-style forward)
    input_ids = jax.random.randint(k_ids, (B, S), 0, VOCAB, dtype=jnp.int32)
    attention_mask = jnp.ones((B, S), dtype=jnp.int32)
    token_type_ids = jnp.zeros((B, S), dtype=jnp.int32)

    # deterministic parameters
    stub_params = {
        "tok_emb": jax.random.normal(k_tok, (VOCAB, H), dtype=jnp.float32) * 0.02,
        "typ_emb": jax.random.normal(k_typ, (2, H), dtype=jnp.float32) * 0.02,
    }
    bound = 1.0 / jnp.sqrt(jnp.float32(H))
    fc_weight = jax.random.uniform(k_w, (C, H), jnp.float32, -bound, bound)
    fc_bias = jax.random.uniform(k_b, (C,), jnp.float32, -bound, bound)

    # --- small-batch (single invocation) path, full module forward ---
    out, last_hidden_state = model_forward(
        input_ids, attention_mask, token_type_ids, stub_params, fc_weight, fc_bias)
    out = jax.block_until_ready(out)

    ref_logits = last_hidden_state[:, 0, :] @ fc_weight.T + fc_bias
    ref = jax.nn.softmax(ref_logits, axis=1)
    assert out.shape == (B, C)
    assert jnp.allclose(out, ref, atol=2e-3, rtol=0), (out, ref)   # approx rcp tolerance
    assert jnp.allclose(jnp.sum(out, axis=1), 1.0, atol=1e-5)

    # --- batched (parallel grid) path ---
    B2 = 16
    cls2 = jax.random.normal(k_h2, (B2, H), dtype=jnp.float32)
    out2 = cls_head_softmax(cls2, fc_weight, fc_bias)
    out2 = jax.block_until_ready(out2)
    ref2 = jax.nn.softmax(cls2 @ fc_weight.T + fc_bias, axis=1)
    assert out2.shape == (B2, C)
    assert jnp.allclose(out2, ref2, atol=2e-3, rtol=0), (out2, ref2)
    assert jnp.allclose(jnp.sum(out2, axis=1), 1.0, atol=1e-5)

    print("KERNEL_OK")
</pallas_src>

<mosaic_0001>
module attributes {stable_mosaic.version = 11 : i64} {
  func.func @_cls_head_kernel(%arg0: memref<2x768xf32, #tpu.memory_space<vmem>>, %arg1: memref<2x768xf32, #tpu.memory_space<vmem>>, %arg2: memref<2xf32, #tpu.memory_space<smem>>, %arg3: memref<2x2xf32, #tpu.memory_space<vmem>>) attributes {dimension_semantics = [], scalar_prefetch = 0 : i64, scratch_operands = 0 : i64, tpu.core_type = #tpu.core_type<tc>} {
    %c0 = arith.constant 0 : index
    %c0_0 = arith.constant 0 : index
    %0 = vector.load %arg0[%c0, %c0_0] : memref<2x768xf32, #tpu.memory_space<vmem>>, vector<2x768xf32>
    %c1 = arith.constant 1 : index
    %c0_1 = arith.constant 0 : index
    %1 = vector.load %arg1[%c1, %c0_1] : memref<2x768xf32, #tpu.memory_space<vmem>>, vector<1x768xf32>
    %c0_2 = arith.constant 0 : index
    %c0_3 = arith.constant 0 : index
    %2 = vector.load %arg1[%c0_2, %c0_3] : memref<2x768xf32, #tpu.memory_space<vmem>>, vector<1x768xf32>
    %3 = arith.subf %1, %2 : vector<1x768xf32>
    %c1_4 = arith.constant 1 : index
    %4 = memref.load %arg2[%c1_4] : memref<2xf32, #tpu.memory_space<smem>>
    %c0_5 = arith.constant 0 : index
    %5 = memref.load %arg2[%c0_5] : memref<2xf32, #tpu.memory_space<smem>>
    %6 = arith.subf %4, %5 : f32
    %7 = vector.broadcast %3 : vector<1x768xf32> to vector<2x768xf32>
    %8 = arith.mulf %0, %7 : vector<2x768xf32>
    %cst = arith.constant dense<0.000000e+00> : vector<2xf32>
    %9 = vector.multi_reduction <add>, %8, %cst [1] : vector<2x768xf32> to vector<2xf32>
    %10 = vector.shape_cast %9 : vector<2xf32> to vector<2x1xf32>
    %11 = vector.broadcast %6 : f32 to vector<2x1xf32>
    %12 = arith.addf %10, %11 : vector<2x1xf32>
    %cst_6 = arith.constant 0.000000e+00 : f32
    %13 = vector.broadcast %cst_6 : f32 to vector<2x1xf32>
    %14 = arith.subf %13, %12 : vector<2x1xf32>
    %15 = math.exp %14 : vector<2x1xf32>
    %cst_7 = arith.constant 1.000000e+00 : f32
    %16 = vector.broadcast %cst_7 : f32 to vector<2x1xf32>
    %17 = arith.addf %16, %15 : vector<2x1xf32>
    %18 = tpu.reciprocal %17 {approx = true} : vector<2x1xf32> -> vector<2x1xf32>
    %cst_8 = arith.constant 1.000000e+00 : f32
    %19 = vector.broadcast %cst_8 : f32 to vector<2x1xf32>
    %20 = arith.subf %19, %18 : vector<2x1xf32>
    %c0_9 = arith.constant 0 : index
    %c0_10 = arith.constant 0 : index
    %21 = vector.load %arg3[%c0_9, %c0_10] : memref<2x2xf32, #tpu.memory_space<vmem>>, vector<2x1xf32>
    tpu.vector_store %arg3[%c0_9, %c0_10], %20 {strides = array<i32>} : memref<2x2xf32, #tpu.memory_space<vmem>>, vector<2x1xf32>,
    %c0_11 = arith.constant 0 : index
    %c1_12 = arith.constant 1 : index
    %22 = vector.load %arg3[%c0_11, %c1_12] : memref<2x2xf32, #tpu.memory_space<vmem>>, vector<2x1xf32>
    tpu.vector_store %arg3[%c0_11, %c1_12], %18 {strides = array<i32>} : memref<2x2xf32, #tpu.memory_space<vmem>>, vector<2x1xf32>,
    return
  }
}

</mosaic_0001>

<llo_original>
// kernel: tpu_custom_call.1
$region0: #{tpu_custom_call.1}
  #allocation0 [shape = 'u32[]', space=smem, size = 0x4, offset = 0x4, fixed_abs, tag = 'smem constant byte address 0x4 - core index']
  #allocation1 [shape = 'u32[144,128]{1,0:T(1,128)}', space=vmem, size = 0x12000, scoped, tag = 'internal scratch']
  %s0 = inlined_call_operand.hbm [shape: f32[2,768], index: 0, kind: input, shape index: {}]
  %s1 = inlined_call_operand.hbm [shape: f32[2,768], index: 1, kind: input, shape index: {}]
  %s2 = inlined_call_operand.vmem [shape: f32[2], index: 2, kind: input, shape index: {}]
  %s3 = inlined_call_operand.hbm [shape: f32[2,2], index: 3, kind: output, shape index: {}]
  %s4 = sld [smem:[#allocation0]]
  $region34: #{tpu_custom_call.1} parent=0
    _
  %s6 = ssub.s32 1, %s4
  %s7 = scalar_select 0, %s6, %s4
  $region1: #{tpu_custom_call.1} parent=0
    #allocation2 [shape = 'u8[6144]{0}', space=vmem, size = 0x1800, scoped, tag = 'input window, operand 0, single buffered']
    #allocation3 [shape = 's32[1]{0}', space=sflag, size = 0x4, scoped, tag = 'scoped memory for tpu_custom_call.1']
    #allocation4 [shape = 's32[1]{0}', space=sflag, size = 0x4, scoped, tag = 'scoped memory for tpu_custom_call.1']
    #allocation5 [shape = 's32[1]{0}', space=sflag, size = 0x4, scoped, tag = 'scoped memory for tpu_custom_call.1']
    #allocation6 [shape = 'u8[6144]{0}', space=vmem, size = 0x1800, scoped, tag = 'input window, operand 1, single buffered']
    #allocation7 [shape = 's32[1]{0}', space=sflag, size = 0x4, scoped, tag = 'scoped memory for tpu_custom_call.1']
    #allocation8 [shape = 'u8[512]{0}', space=smem, size = 0x200, scoped, tag = 'input window, operand 2, single buffered']
    #allocation9 [shape = 'u8[1024]{0}', space=vmem, size = 0x400, scoped, tag = 'output window, operand 0, single buffered']
    %8 = vsyncpa [#allocation3], 0
    %9 = vsyncpa [#allocation7], 0
    %10 = vsyncpa [#allocation5], 0
    %11 = vsyncpa [#allocation4], 0
    // Predicated region
    $region2: #{tpu_custom_call.1} parent=1 // pred_check
      _
    $region3: #{tpu_custom_call.1} parent=1 // pred_check_branch
      %13 = sbr.rel (0) target = $region5
    $region4: #{tpu_custom_call.1} parent=1 // pred_region
      %s15 = ssub.s32 192, 192
      %16 = vsyncadd [#allocation3], %s15
      %s18 = sshll.u32 [#allocation2], 4
      %s19 = int_to_ptr.vmem [resolvable:$true] %s18
      %21 = dma.hbm_to_vmem [thread:$0]  %s0, 192, %s19, [#allocation3]
    $region5: #{tpu_custom_call.1} parent=1 // pred_fallthru
      _
    // Predicated region
    $region6: #{tpu_custom_call.1} parent=1 // pred_check
      _
    $region7: #{tpu_custom_call.1} parent=1 // pred_check_branch
      %23 = sbr.rel (0) target = $region9
    $region8: #{tpu_custom_call.1} parent=1 // pred_region
      %s25 = ssub.s32 192, 192
      %26 = vsyncadd [#allocation7], %s25
      %s28 = sshll.u32 [#allocation6], 4
      %s29 = int_to_ptr.vmem [resolvable:$true] %s28
      %31 = dma.hbm_to_vmem [thread:$0]  %s1, 192, %s29, [#allocation7]
    $region9: #{tpu_custom_call.1} parent=1 // pred_fallthru
      _
    // Predicated region
    $region10: #{tpu_custom_call.1} parent=1 // pred_check
      _
    $region11: #{tpu_custom_call.1} parent=1 // pred_check_branch
      %33 = sbr.rel (0) target = $region13
    $region12: #{tpu_custom_call.1} parent=1 // pred_region
      %s35 = ssub.s32 16, 16
      %36 = vsyncadd [#allocation5], %s35
      %s38 = sshll.u32 %s2, 4
      %s39 = int_to_ptr.vmem [resolvable:$true] %s38
      %41 = dma.vmem_to_smem %s39, 16, [#allocation8], [#allocation5]
    $region13: #{tpu_custom_call.1} parent=1 // pred_fallthru
      _
    // Predicated region
    $region14: #{tpu_custom_call.1} parent=1 // pred_check
      _
    $region15: #{tpu_custom_call.1} parent=1 // pred_check_branch
      %43 = sbr.rel (0) target = $region17
    $region16: #{tpu_custom_call.1} parent=1 // pred_region
      %44 = dma.done [#allocation3], 192
    $region17: #{tpu_custom_call.1} parent=1 // pred_fallthru
      _
    // Predicated region
    $region18: #{tpu_custom_call.1} parent=1 // pred_check
      _
    $region19: #{tpu_custom_call.1} parent=1 // pred_check_branch
      %46 = sbr.rel (0) target = $region21
    $region20: #{tpu_custom_call.1} parent=1 // pred_region
      %47 = dma.done [#allocation7], 192
    $region21: #{tpu_custom_call.1} parent=1 // pred_fallthru
      _
    // Predicated region
    $region22: #{tpu_custom_call.1} parent=1 // pred_check
      _
    $region23: #{tpu_custom_call.1} parent=1 // pred_check_branch
      %49 = sbr.rel (0) target = $region25
    $region24: #{tpu_custom_call.1} parent=1 // pred_region
      %50 = dma.done [#allocation5], 16
    $region25: #{tpu_custom_call.1} parent=1 // pred_fallthru
      _
    %51 = sfence
    %v52 = vld [vmem:[#allocation2] sm:$0xff]
    %v53 = vld [vmem:[#allocation2 + $0x8] sm:$0xf]
    %s54 = scalar_lea.vmem [#allocation6], 1
    %v55 = vld [vmem:[%s54] ss:$2 sm:$0x3f]
    %v56 = vld [vmem:[#allocation6] ss:$2 sm:$0x3f]
    %v57 = vsub.f32 %v55, %v56
    %s58 = sld [smem:[#allocation8 + $0x1]]
    %s59 = sld [smem:[#allocation8]]
    %s60 = ssub.f32 %s58, %s59
    %v62 = vlaneseq
    %v63 = vshrl.u32 %v62, 7
    %v64 = vsub.s32 0, %v63
    %v65 = vrot.slane %v57, %v64
    %v66 = vlaneseq
    %v67 = vshrl.u32 %v66, 7
    %v68 = vsub.s32 1, %v67
    %v69 = vrot.slane %v57, %v68
    %v70 = vlaneseq
    %v71 = vshrl.u32 %v70, 7
    %v72 = vsub.s32 2, %v71
    %v73 = vrot.slane %v57, %v72
    %v74 = vlaneseq
    %v75 = vshrl.u32 %v74, 7
    %v76 = vsub.s32 3, %v75
    %v77 = vrot.slane %v57, %v76
    %v78 = vlaneseq
    %v79 = vshrl.u32 %v78, 7
    %v80 = vsub.s32 4, %v79
    %v81 = vrot.slane %v57, %v80
    %v82 = vlaneseq
    %v83 = vshrl.u32 %v82, 7
    %v84 = vsub.s32 5, %v83
    %v85 = vrot.slane %v57, %v84
    %v86 = vcombine.low %v65, %v69
    %v87 = vcombine.low %v73, %v77
    %v89 = vunpack.c.l.s4 1983009808
    %v90 = vunpack.c.0.s8 %v89
    %v91 = vlaneseq
    %v92 = vshrl.u32 %v91, 7
    %v93 = vsub.s32 %v90, %v92
    %v94 = vrot.slane %v86, %v93
    %v96 = vunpack.c.l.s4 1983009808
    %v97 = vunpack.c.0.s8 %v96
    %v98 = vlaneseq
    %v99 = vshrl.u32 %v98, 7
    %v100 = vsub.s32 %v97, %v99
    %v101 = vrot.slane %v87, %v100
    %v102 = vcombine.low %v94, %v101
    %v103 = vcombine.low %v81, %v85
    %v105 = vunpack.c.l.s4 1983009808
    %v106 = vunpack.c.0.s8 %v105
    %v107 = vlaneseq
    %v108 = vshrl.u32 %v107, 7
    %v109 = vsub.s32 %v106, %v108
    %v110 = vrot.slane %v103, %v109
    %v113 = vmul.f32 %v52, %v102
    %v114 = vmul.f32 %v53, %v110
    %v117 = vcombine.high %v113, %v113
    %v119 = vunpack.c.l.s4 1983009808
    %v120 = vunpack.c.0.s8 %v119
    %v121 = vlaneseq
    %v122 = vshrl.u32 %v121, 7
    %v123 = vsub.s32 %v120, %v122
    %v124 = vrot.slane %v113, %v123
    %v126 = vunpack.c.l.s4 1983009808
    %v127 = vunpack.c.0.s8 %v126
    %v128 = vlaneseq
    %v129 = vshrl.u32 %v128, 7
    %v130 = vsub.s32 %v127, %v129
    %v131 = vrot.slane %v117, %v130
    %v132 = vcombine.high %v124, %v124
    %v133 = vcombine.high %v131, %v131
    %v135 = vunpack.c.l.s4 1983009808
    %v136 = vunpack.c.0.s8 %v135
    %v137 = vlaneseq
    %v138 = vshrl.u32 %v137, 7
    %v139 = vsub.s32 %v136, %v138
    %v140 = vrot.slane %v114, %v139
    %v141 = vcombine.high %v140, %v140
    %vm148 = vcmask 1041408
    %v149 = vsel %vm148, %v124, 0.0
    %v150 = vsel %vm148, %v132, 0.0
    %v151 = vadd.f32 %v149, %v150
    %v152 = vsel %vm148, %v131, 0.0
    %v153 = vadd.f32 %v151, %v152
    %v154 = vsel %vm148, %v133, 0.0
    %v155 = vadd.f32 %v153, %v154
    %v156 = vsel %vm148, %v140, 0.0
    %v157 = vadd.f32 %v155, %v156
    %v158 = vsel %vm148, %v141, 0.0
    %v159 = vadd.f32 %v157, %v158
    %160 = vadd.xlane.f32.xlu0 %v159
    %v161 = vpop.xlane.xlu0 %160
    %v162 = vstv %s60
    %v163 = vadd.f32 %v161, %v162
    %v164 = vsub.f32 0.0, %v163
    %v165 = vmul.f32 %v164, 1.442695
    %v166 = vpow.pop %v165
    %v167 = vadd.f32 %v166, 1.0
    %v168 = vrcp.pop %v167
    %v169 = vsub.f32 1.0, %v168
    %vm170 = vcmask 1024
    %171 = vst.msk [vmem:[#allocation9] sm:$0x3] %vm170, %v169
    %vm172 = vcmask 9224
    %173 = vst.msk [vmem:[#allocation9] sm:$0x3] %vm172, %v168
    // Predicated region
    $region26: #{tpu_custom_call.1} parent=1 // pred_check
      _
    $region27: #{tpu_custom_call.1} parent=1 // pred_check_branch
      %175 = sbr.rel (0) target = $region29
    $region28: #{tpu_custom_call.1} parent=1 // pred_region
      %s177 = ssub.s32 32, 32
      %178 = vsyncadd [#allocation4], %s177
      %s180 = sshll.u32 [#allocation9], 4
      %s181 = int_to_ptr.vmem [resolvable:$true] %s180
      %183 = dma.vmem_to_hbm [thread:$0]  %s181, 32, %s3, [#allocation4]
    $region29: #{tpu_custom_call.1} parent=1 // pred_fallthru
      _
    // Predicated region
    $region30: #{tpu_custom_call.1} parent=1 // pred_check
      _
    $region31: #{tpu_custom_call.1} parent=1 // pred_check_branch
      %185 = sbr.rel (0) target = $region33
    $region32: #{tpu_custom_call.1} parent=1 // pred_region
      %186 = dma.done [#allocation4], 32
    $region33: #{tpu_custom_call.1} parent=1 // pred_fallthru
      _
    %187 = vsyncpa [#allocation3], 1
    %188 = vsyncpa [#allocation7], 1
    %189 = vsyncpa [#allocation4], 1
    %190 = vsyncpa [#allocation5], 1

</llo_original>
